<compile_context>
chip_gen: v5e
topology: v5e:2x2
jax: 0.10.0
libtpu: 0.0.40
codegen_flags: <defaults>
</compile_context>

<pallas_src>
import functools

import jax
import jax.numpy as jnp
from jax.experimental import pallas as pl
from jax.experimental.pallas import tpu as pltpu


def _rotary_kernel(tab_ref, qk_ref, out_ref, *, r2, rotary_dim):
    """Rotate the first `rotary_dim` channels of one (TS, H, D) q-or-k block.

    tab_ref: (2, TS, r2) float32 -- row 0 = cos, row 1 = sin (already
             round-tripped through the qkv dtype in the wrapper).
    qk_ref / out_ref: (TS, H, D) in the qkv dtype.
    """
    head_dim = out_ref.shape[-1]

    c = tab_ref[0][:, None, :]          # (TS, 1, r2) f32, broadcast over heads
    s = tab_ref[1][:, None, :]

    x = qk_ref[...]                     # (TS, H, D), input dtype
    x1 = x[:, :, :r2].astype(jnp.float32)
    x2 = x[:, :, r2:rotary_dim].astype(jnp.float32)

    # Direct partial stores: no concatenates, no full-block f32 temporaries.
    out_ref[:, :, :r2] = (x1 * c - x2 * s).astype(out_ref.dtype)
    out_ref[:, :, r2:rotary_dim] = (x1 * s + x2 * c).astype(out_ref.dtype)
    if rotary_dim < head_dim:
        # Pass-through tail: straight copy, no f32 round-trip.
        out_ref[:, :, rotary_dim:] = x[:, :, rotary_dim:]


def _vmem_capacity_bytes():
    try:
        return int(pltpu.get_tpu_info().vmem_capacity_bytes)
    except Exception:
        return 64 * 1024 * 1024          # conservative (v7x-sized) fallback


@functools.partial(
    jax.jit,
    static_argnames=("rotary_dim", "base", "seqlen_offset", "seq_tile"),
    donate_argnums=(0,),                 # qkv buffer is reused in place (v never moves)
)
def rotary_embedding_qkv(qkv, *, rotary_dim, base=10000, seqlen_offset=0,
                         seq_tile=None):
    """Pallas equivalent of RotaryEmbedding.forward (scale_base=None path).

    qkv: (B, S, 3, H, D).  Returns the new qkv with rotary applied to q and k.
    NOTE: `qkv` is donated; do not reuse the argument after calling.
    """
    B, S, three, H, D = qkv.shape
    assert three == 3
    assert rotary_dim % 2 == 0 and 0 < rotary_dim <= D
    r2 = rotary_dim // 2
    itemsize = jnp.dtype(qkv.dtype).itemsize

    # cos/sin for positions [seqlen_offset, seqlen_offset + S): computed in f32,
    # round-tripped through the qkv dtype (exactly what the torch module
    # caches), then stacked into ONE small f32 table.
    # TODO(synk): the torch module's host-side lazy cache (_seq_len_cached etc.)
    # has no kernel equivalent; the tiny table is recomputed per call.
    inv_freq = 1.0 / (
        base ** (jnp.arange(0, rotary_dim, 2, dtype=jnp.float32) / rotary_dim)
    )
    t = jnp.arange(seqlen_offset, seqlen_offset + S, dtype=jnp.float32)
    freqs = jnp.outer(t, inv_freq)                                 # (S, r2)
    cos = jnp.cos(freqs).astype(qkv.dtype).astype(jnp.float32)
    sin = jnp.sin(freqs).astype(qkv.dtype).astype(jnp.float32)
    table = jnp.stack([cos, sin], axis=0)                          # (2, S, r2) f32

    # ---- sequence tile: size from the chip's VMEM, accounting for f32 temps --
    vmem_cap = _vmem_capacity_bytes()
    budget = min(vmem_cap // 4, 32 * 1024 * 1024)   # ~16 MiB v7x, ~32 MiB v5e/v6e
    per_pos = (4 * H * D * itemsize                 # in + out blocks, double-buffered
               + 16 * r2                            # cos/sin block, double-buffered f32
               + 16 * H * rotary_dim)               # in-kernel f32 temporaries
    ts = max(1, budget // per_pos) if seq_tile is None else seq_tile
    if ts >= S:
        ts = S
    else:
        ts = max(8, (ts // 8) * 8)                  # sublane rule for (ts, r2) table block
        ts = min(ts, S)
    # TODO(synk): when S % ts != 0 the ragged last tile relies on Pallas masking
    # the out-of-range writeback (reads past S feed dead lanes only).

    # Grid: (seq tiles, batch, q/k).  q/k innermost + table index depending only
    # on the seq tile => the cos/sin block is fetched once per seq tile.
    grid = (pl.cdiv(S, ts), B, 2)

    tab_spec = pl.BlockSpec((2, ts, r2), lambda si, b, qk: (0, si, 0))
    qk_spec = pl.BlockSpec(
        (pl.Squeezed(), ts, pl.Squeezed(), H, D),
        lambda si, b, qk: (b, si, qk, 0, 0),
    )

    flops = 6 * B * S * H * rotary_dim              # q + k rotary mul/adds
    bytes_accessed = 4 * B * S * H * D * itemsize + table.size * 4

    return pl.pallas_call(
        functools.partial(_rotary_kernel, r2=r2, rotary_dim=rotary_dim),
        out_shape=jax.ShapeDtypeStruct(qkv.shape, qkv.dtype),
        grid_spec=pltpu.PrefetchScalarGridSpec(
            num_scalar_prefetch=0,
            grid=grid,
            in_specs=[tab_spec, qk_spec],
            out_specs=qk_spec,
        ),
        input_output_aliases={1: 0},                 # output shares qkv's buffer
        compiler_params=pltpu.CompilerParams(
            dimension_semantics=("parallel", "parallel", "parallel"),
            vmem_limit_bytes=min(vmem_cap // 2, 64 * 1024 * 1024),
        ),
        cost_estimate=pl.CostEstimate(
            flops=flops, transcendentals=0, bytes_accessed=bytes_accessed
        ),
    )(table, qkv)


def _reference_rotary(qkv, rotary_dim, base=10000, seqlen_offset=0):
    """Pure-JAX mirror of RotaryEmbedding.forward (scale_base=None)."""
    B, S, three, H, D = qkv.shape
    r2 = rotary_dim // 2
    inv_freq = 1.0 / (
        base ** (jnp.arange(0, rotary_dim, 2, dtype=jnp.float32) / rotary_dim)
    )
    t = jnp.arange(seqlen_offset, seqlen_offset + S, dtype=jnp.float32)
    freqs = jnp.outer(t, inv_freq)
    c = jnp.cos(freqs).astype(qkv.dtype).astype(jnp.float32)[:, None, :]
    s = jnp.sin(freqs).astype(qkv.dtype).astype(jnp.float32)[:, None, :]

    def rot(x):
        x1 = x[..., :r2].astype(jnp.float32)
        x2 = x[..., r2:rotary_dim].astype(jnp.float32)
        xp = x[..., rotary_dim:]
        o = jnp.concatenate([x1 * c - x2 * s, x1 * s + x2 * c], axis=-1)
        return jnp.concatenate([o.astype(qkv.dtype), xp], axis=-1)

    q = rot(qkv[:, :, 0])
    k = rot(qkv[:, :, 1])
    v = qkv[:, :, 2]
    return jnp.stack([q, k, v], axis=2)


if __name__ == "__main__":
    key = jax.random.PRNGKey(0)
    B, S, H, D = 2, 8, 4, 32
    rotary_dim = 16  # < head_dim to exercise the pass-through path

    qkv = jax.random.normal(key, (B, S, 3, H, D), dtype=jnp.float32)

    # Compute the reference BEFORE the kernel call: qkv is donated (in-place).
    ref = jax.block_until_ready(_reference_rotary(qkv, rotary_dim))

    out = rotary_embedding_qkv(qkv, rotary_dim=rotary_dim)
    out = jax.block_until_ready(out)

    assert out.shape == ref.shape and out.dtype == ref.dtype
    assert jnp.allclose(out, ref, rtol=1e-5, atol=1e-5), float(
        jnp.max(jnp.abs(out - ref))
    )

    print("KERNEL_OK")
</pallas_src>

<mosaic_0001>
module attributes {stable_mosaic.version = 11 : i64} {
  func.func @_rotary_kernel(%arg0: i32, %arg1: i32, %arg2: i32, %arg3: memref<2x8x8xf32, #tpu.memory_space<vmem>>, %arg4: memref<1x8x1x4x32xf32, #tpu.memory_space<vmem>>, %arg5: memref<1x8x1x4x32xf32, #tpu.memory_space<vmem>>) attributes {dimension_semantics = [#tpu.dimension_semantics<parallel>, #tpu.dimension_semantics<parallel>, #tpu.dimension_semantics<parallel>], iteration_bounds = array<i64: 1, 2, 2>, scalar_prefetch = 0 : i64, scratch_operands = 0 : i64, tpu.core_type = #tpu.core_type<tc>, window_params = [{transform_indices = @transform_0, window_bounds = array<i64: 2, 8, 8>}, {transform_indices = @transform_1, window_bounds = array<i64: 1, 8, 1, 4, 32>}, {transform_indices = @transform_2, window_bounds = array<i64: 1, 8, 1, 4, 32>}]} {
    %c0 = arith.constant 0 : index
    %c0_0 = arith.constant 0 : index
    %c0_1 = arith.constant 0 : index
    %0 = vector.load %arg3[%c0, %c0_0, %c0_1] : memref<2x8x8xf32, #tpu.memory_space<vmem>>, vector<1x8x8xf32>
    %1 = vector.shape_cast %0 : vector<1x8x8xf32> to vector<8x8xf32>
    %2 = vector.shape_cast %1 : vector<8x8xf32> to vector<8x1x8xf32>
    %c1 = arith.constant 1 : index
    %c0_2 = arith.constant 0 : index
    %c0_3 = arith.constant 0 : index
    %3 = vector.load %arg3[%c1, %c0_2, %c0_3] : memref<2x8x8xf32, #tpu.memory_space<vmem>>, vector<1x8x8xf32>
    %4 = vector.shape_cast %3 : vector<1x8x8xf32> to vector<8x8xf32>
    %5 = vector.shape_cast %4 : vector<8x8xf32> to vector<8x1x8xf32>
    %c0_4 = arith.constant 0 : index
    %c0_5 = arith.constant 0 : index
    %c0_6 = arith.constant 0 : index
    %c0_7 = arith.constant 0 : index
    %c0_8 = arith.constant 0 : index
    %6 = vector.load %arg4[%c0_4, %c0_5, %c0_6, %c0_7, %c0_8] : memref<1x8x1x4x32xf32, #tpu.memory_space<vmem>>, vector<1x8x1x4x32xf32>
    %7 = vector.shape_cast %6 : vector<1x8x1x4x32xf32> to vector<8x4x32xf32>
    %8 = vector.extract_strided_slice %7 {offsets = [0, 0, 0], sizes = [8, 4, 8], strides = [1, 1, 1]} : vector<8x4x32xf32> to vector<8x4x8xf32>
    %9 = vector.extract_strided_slice %7 {offsets = [0, 0, 8], sizes = [8, 4, 8], strides = [1, 1, 1]} : vector<8x4x32xf32> to vector<8x4x8xf32>
    %10 = vector.broadcast %2 : vector<8x1x8xf32> to vector<8x4x8xf32>
    %11 = arith.mulf %8, %10 : vector<8x4x8xf32>
    %12 = vector.broadcast %5 : vector<8x1x8xf32> to vector<8x4x8xf32>
    %13 = arith.mulf %9, %12 : vector<8x4x8xf32>
    %14 = arith.subf %11, %13 : vector<8x4x8xf32>
    %c0_9 = arith.constant 0 : index
    %c0_10 = arith.constant 0 : index
    %c0_11 = arith.constant 0 : index
    %c0_12 = arith.constant 0 : index
    %c0_13 = arith.constant 0 : index
    %15 = vector.load %arg5[%c0_9, %c0_10, %c0_11, %c0_12, %c0_13] : memref<1x8x1x4x32xf32, #tpu.memory_space<vmem>>, vector<1x8x1x4x8xf32>
    %16 = vector.shape_cast %15 : vector<1x8x1x4x8xf32> to vector<8x4x8xf32>
    %17 = vector.shape_cast %14 : vector<8x4x8xf32> to vector<1x8x1x4x8xf32>
    tpu.vector_store %arg5[%c0_9, %c0_10, %c0_11, %c0_12, %c0_13], %17 {strides = array<i32>} : memref<1x8x1x4x32xf32, #tpu.memory_space<vmem>>, vector<1x8x1x4x8xf32>,
    %18 = vector.broadcast %5 : vector<8x1x8xf32> to vector<8x4x8xf32>
    %19 = arith.mulf %8, %18 : vector<8x4x8xf32>
    %20 = vector.broadcast %2 : vector<8x1x8xf32> to vector<8x4x8xf32>
    %21 = arith.mulf %9, %20 : vector<8x4x8xf32>
    %22 = arith.addf %19, %21 : vector<8x4x8xf32>
    %c0_14 = arith.constant 0 : index
    %c0_15 = arith.constant 0 : index
    %c0_16 = arith.constant 0 : index
    %c0_17 = arith.constant 0 : index
    %c8 = arith.constant 8 : index
    %23 = vector.load %arg5[%c0_14, %c0_15, %c0_16, %c0_17, %c8] : memref<1x8x1x4x32xf32, #tpu.memory_space<vmem>>, vector<1x8x1x4x8xf32>
    %24 = vector.shape_cast %23 : vector<1x8x1x4x8xf32> to vector<8x4x8xf32>
    %25 = vector.shape_cast %22 : vector<8x4x8xf32> to vector<1x8x1x4x8xf32>
    tpu.vector_store %arg5[%c0_14, %c0_15, %c0_16, %c0_17, %c8], %25 {strides = array<i32>} : memref<1x8x1x4x32xf32, #tpu.memory_space<vmem>>, vector<1x8x1x4x8xf32>,
    %26 = vector.extract_strided_slice %7 {offsets = [0, 0, 16], sizes = [8, 4, 16], strides = [1, 1, 1]} : vector<8x4x32xf32> to vector<8x4x16xf32>
    %c0_18 = arith.constant 0 : index
    %c0_19 = arith.constant 0 : index
    %c0_20 = arith.constant 0 : index
    %c0_21 = arith.constant 0 : index
    %c16 = arith.constant 16 : index
    %27 = vector.load %arg5[%c0_18, %c0_19, %c0_20, %c0_21, %c16] : memref<1x8x1x4x32xf32, #tpu.memory_space<vmem>>, vector<1x8x1x4x16xf32>
    %28 = vector.shape_cast %27 : vector<1x8x1x4x16xf32> to vector<8x4x16xf32>
    %29 = vector.shape_cast %26 : vector<8x4x16xf32> to vector<1x8x1x4x16xf32>
    tpu.vector_store %arg5[%c0_18, %c0_19, %c0_20, %c0_21, %c16], %29 {strides = array<i32>} : memref<1x8x1x4x32xf32, #tpu.memory_space<vmem>>, vector<1x8x1x4x16xf32>,
    return
  }
  func.func @transform_0(%arg0: i32, %arg1: i32, %arg2: i32) -> (i32, i32, i32) {
    %c0_i32 = arith.constant 0 : i32
    %c0_i32_0 = arith.constant 0 : i32
    %c0_i32_1 = arith.constant 0 : i32
    return %c0_i32, %arg0, %c0_i32_0 : i32, i32, i32
  }
  func.func @transform_1(%arg0: i32, %arg1: i32, %arg2: i32) -> (i32, i32, i32, i32, i32) {
    %c0_i32 = arith.constant 0 : i32
    %c0_i32_0 = arith.constant 0 : i32
    %c0_i32_1 = arith.constant 0 : i32
    return %arg1, %arg0, %arg2, %c0_i32, %c0_i32_0 : i32, i32, i32, i32, i32
  }
  func.func @transform_2(%arg0: i32, %arg1: i32, %arg2: i32) -> (i32, i32, i32, i32, i32) {
    %c0_i32 = arith.constant 0 : i32
    %c0_i32_0 = arith.constant 0 : i32
    %c0_i32_1 = arith.constant 0 : i32
    return %arg1, %arg0, %arg2, %c0_i32, %c0_i32_0 : i32, i32, i32, i32, i32
  }
}

</mosaic_0001>

<llo_original>
// kernel: rotary_embedding_qkv.1
$region0: #{rotary_embedding_qkv.1}
  #allocation0 [shape = 'u32[]', space=smem, size = 0x4, offset = 0x4, fixed_abs, tag = 'smem constant byte address 0x4 - core index']
  #allocation1 [shape = 'u32[72,128]{1,0:T(1,128)}', space=vmem, size = 0x9000, scoped, tag = 'internal scratch']
  %s0 = inlined_call_operand.vmem [shape: f32[2,8,8], index: 0, kind: input, shape index: {}]
  %s1 = inlined_call_operand.hbm [shape: f32[2,8,3,4,32], index: 1, kind: input, shape index: {}, may-alias: {1,2}]
  %s2 = inlined_call_operand.hbm [shape: f32[2,8,3,4,32], index: 2, kind: output, shape index: {}, may-alias: {1,2}]
  %s3 = sld [smem:[#allocation0]]
  $region45: #{rotary_embedding_qkv.1} parent=0
    _
  %s5 = ssub.s32 1, %s3
  %s6 = scalar_select 0, %s5, %s3
  $region1: #{rotary_embedding_qkv.1} parent=0
    #allocation2 [shape = 'u8[32768]{0}', space=vmem, size = 0x8000, scoped, tag = 'input window, operand 1']
    #allocation3 [shape = 's32[2]{0}', space=sflag, size = 0x8, scoped, tag = 'scoped memory for rotary_embedding_qkv.1']
    #allocation4 [shape = 's32[2]{0}', space=sflag, size = 0x8, scoped, tag = 'scoped memory for rotary_embedding_qkv.1']
    #allocation5 [shape = 'u8[32768]{0}', space=vmem, size = 0x8000, scoped, tag = 'output window, operand 0']
    %7 = vsyncpa [#allocation3], 0
    %s8 = scalar_lea.sflag [#allocation3], 1
    %9 = vsyncpa %s8, 0
    %10 = vsyncpa [#allocation4], 0
    %s11 = scalar_lea.sflag [#allocation4], 1
    %12 = vsyncpa %s11, 0
    loop: start=0, step=1, limit=6
    $region2: #{rotary_embedding_qkv.1} parent=1 // loop_pre_header
      _
    $region3: #{rotary_embedding_qkv.1} parent=1 // loop_header
      %s14 = sphi 0, %s18
      %p15 = scmp.ge.s32.totalorder %s14, 6
      %s21 = sphi 0, %s40
      %s22 = sphi 0, %s36
      %s23 = sphi 0, %s32
      %s24 = sphi 0, %s21
      %s25 = sphi 0, %s22
      %s26 = sphi 0, %s23
      %s27 = sphi 0, %s24
      %s28 = sphi 0, %s25
      %s29 = sphi 0, %s26
      %s43 = sphi 0, %s45
      %s46 = sphi 0, %s43
      %s47 = sphi 0, %s46
      %s63 = sphi 0, %s47
      %s73 = sphi 0, %s75
      %s76 = sphi 0, %s73
      %s77 = sphi 0, %s76
      %s93 = sphi 0, %s77
      %s103 = sphi 0, %s105
      %s106 = sphi 0, %s103
      %s107 = sphi 0, %s106
      %s123 = sphi 0, %s107
    $region4: #{rotary_embedding_qkv.1} parent=1 // loop_header_branch
      %17 = sbr.rel (%p15) target = $region8
    $region5: #{rotary_embedding_qkv.1} parent=1 // loop_body
      %s19 = ssub.s32 %s14, 1
      %s20 = ssub.s32 %s14, 2
      %s30 = sadd.s32 1, %s23
      %p31 = scmp.ge.s32.totalorder %s30, 2
      %s32 = scalar_select %p31, 0, %s30
      %s33 = sadd.s32 1, %s22
      %s34 = scalar_select %p31, %s33, %s22
      %p35 = scmp.ge.s32.totalorder %s34, 2
      %s36 = scalar_select %p35, 0, %s34
      %s37 = sadd.s32 1, %s21
      %s38 = scalar_select %p35, %s37, %s21
      %p39 = scmp.ge.s32.totalorder %s38, 1
      %s40 = scalar_select %p39, 0, %s38
      %s41 = ssub.s32 %s21, %s40
      %p42 = scmp.eq.s32.totalorder %s41, 0
      %s44 = sadd.s32 %s43, 1
      %s45 = scalar_select %p42, %s43, %s44
      %p48 = pneg %p42
      %p49 = scmp.eq.s32.totalorder %s14, 3
      %p50 = por %p48, %p49
      %p51 = scmp.ne.s32.totalorder %s43, %s46
      %p52 = scmp.eq.s32.totalorder %s14, 0
      %p53 = por %p51, %p52
      %p54 = scmp.ne.s32.totalorder %s43, %s46
      %p55 = scmp.eq.s32.totalorder %s19, 3
      %p56 = por %p54, %p55
      %p57 = scmp.ne.s32.totalorder %s46, %s47
      %p58 = scmp.eq.s32.totalorder %s19, 0
      %p59 = por %p57, %p58
      %p60 = scmp.ne.s32.totalorder %s46, %s47
      %p61 = scmp.eq.s32.totalorder %s20, 3
      %p62 = por %p60, %p61
      %p64 = scmp.ne.s32.totalorder %s47, %s63
      %p65 = scmp.eq.s32.totalorder %s20, 0
      %p66 = por %p64, %p65
      %s67 = ssub.s32 %s22, %s36
      %s68 = ssub.s32 %s21, %s40
      %s69 = sor.u32 %s67, %s68
      %s70 = ssub.s32 %s23, %s32
      %s71 = sor.u32 %s69, %s70
      %p72 = scmp.eq.s32.totalorder %s71, 0
      %s74 = sadd.s32 %s73, 1
      %s75 = scalar_select %p72, %s73, %s74
      %p78 = pneg %p72
      %p79 = scmp.eq.s32.totalorder %s14, 3
      %p80 = por %p78, %p79
      %p81 = scmp.ne.s32.totalorder %s73, %s76
      %p82 = scmp.eq.s32.totalorder %s14, 0
      %p83 = por %p81, %p82
      %p84 = scmp.ne.s32.totalorder %s73, %s76
      %p85 = scmp.eq.s32.totalorder %s19, 3
      %p86 = por %p84, %p85
      %p87 = scmp.ne.s32.totalorder %s76, %s77
      %p88 = scmp.eq.s32.totalorder %s19, 0
      %p89 = por %p87, %p88
      %p90 = scmp.ne.s32.totalorder %s76, %s77
      %p91 = scmp.eq.s32.totalorder %s20, 3
      %p92 = por %p90, %p91
      %p94 = scmp.ne.s32.totalorder %s77, %s93
      %p95 = scmp.eq.s32.totalorder %s20, 0
      %p96 = por %p94, %p95
      %s97 = ssub.s32 %s22, %s36
      %s98 = ssub.s32 %s21, %s40
      %s99 = sor.u32 %s97, %s98
      %s100 = ssub.s32 %s23, %s32
      %s101 = sor.u32 %s99, %s100
      %p102 = scmp.eq.s32.totalorder %s101, 0
      %s104 = sadd.s32 %s103, 1
      %s105 = scalar_select %p102, %s103, %s104
      %p108 = pneg %p102
      %p109 = scmp.eq.s32.totalorder %s14, 3
      %p110 = por %p108, %p109
      %p111 = scmp.ne.s32.totalorder %s103, %s106
      %p112 = scmp.eq.s32.totalorder %s14, 0
      %p113 = por %p111, %p112
      %p114 = scmp.ne.s32.totalorder %s103, %s106
      %p115 = scmp.eq.s32.totalorder %s19, 3
      %p116 = por %p114, %p115
      %p117 = scmp.ne.s32.totalorder %s106, %s107
      %p118 = scmp.eq.s32.totalorder %s19, 0
      %p119 = por %p117, %p118
      %p120 = scmp.ne.s32.totalorder %s106, %s107
      %p121 = scmp.eq.s32.totalorder %s20, 3
      %p122 = por %p120, %p121
      %p124 = scmp.ne.s32.totalorder %s107, %s123
      %p125 = scmp.eq.s32.totalorder %s20, 0
      %p126 = por %p124, %p125
      %p127 = scmp.le.s32.totalorder 1, %s14
      %p128 = scmp.lt.s32.totalorder %s14, 5
      %p129 = pnand %p127, %p128
      %p130 = pneg %p129
      // Predicated region
      $region9: #{rotary_embedding_qkv.1} parent=5 // pred_check
        _
      $region10: #{rotary_embedding_qkv.1} parent=5 // pred_check_branch
        %132 = sbr.rel (%p129) target = $region12
      $region11: #{rotary_embedding_qkv.1} parent=5 // pred_region
        %s133 = ssub.s32 %s14, 1
        // Predicated region
        $region13: #{rotary_embedding_qkv.1} parent=11 // pred_check
          %p134 = pneg %p59
        $region14: #{rotary_embedding_qkv.1} parent=11 // pred_check_branch
          %136 = sbr.rel (%p134) target = $region16
        $region15: #{rotary_embedding_qkv.1} parent=11 // pred_region
          %p137 = scmp.lt.s32.totalorder %s24, 0
          %s138 = scalar_select %p137, %s24, 0
          %s139 = smul.addr %s138, 8
          %s140 = scalar_lea.vmem %s0, %s139
        $region16: #{rotary_embedding_qkv.1} parent=11 // pred_fallthru
          _
      $region12: #{rotary_embedding_qkv.1} parent=5 // pred_fallthru
        _
      %p141 = scmp.lt.s32.totalorder %s14, 4
      // Predicated region
      $region17: #{rotary_embedding_qkv.1} parent=5 // pred_check
        %p142 = pneg %p141
      $region18: #{rotary_embedding_qkv.1} parent=5 // pred_check_branch
        %144 = sbr.rel (%p142) target = $region20
      $region19: #{rotary_embedding_qkv.1} parent=5 // pred_region
        // Predicated region
        $region21: #{rotary_embedding_qkv.1} parent=19 // pred_check
          %p145 = pneg %p83
        $region22: #{rotary_embedding_qkv.1} parent=19 // pred_check_branch
          %147 = sbr.rel (%p145) target = $region24
        $region23: #{rotary_embedding_qkv.1} parent=19 // pred_region
          %s148 = sand.u32 %s73, 1
          %s149 = scalar_lea.sflag [#allocation3], %s148
          %s150 = sand.u32 %s73, 1
          %s151 = smul.addr %s150, 32
          %s152 = scalar_lea.vmem [#allocation2], %s151
          %s153 = smul.u32 8, %s21
          %155 = vsyncadd %s149, 0
          %s156 = smul.addr %s153, 3
          %s157 = sadd.s32 %s23, %s156
          %s158 = smul.addr %s22, 24
          %s159 = sadd.s32 %s157, %s158
          %s160 = smul.addr %s159, 4
          %s161 = scalar_lea.hbm %s1, %s160
          %s162 = sshll.u32 %s161, 4
          %s163 = int_to_ptr.hbm [resolvable:$true] %s162
          %s164 = sshll.u32 %s152, 4
          %s165 = int_to_ptr.vmem [resolvable:$true] %s164
          %170 = dma.hbm_to_vmem [thread:$0]  %s163, 512, %s165, %s149, 192, 64, 4
        $region24: #{rotary_embedding_qkv.1} parent=19 // pred_fallthru
          _
      $region20: #{rotary_embedding_qkv.1} parent=5 // pred_fallthru
        _
      %p171 = scmp.le.s32.totalorder 1, %s14
      %p172 = scmp.lt.s32.totalorder %s14, 5
      %p173 = pnand %p171, %p172
      %p174 = pneg %p173
      // Predicated region
      $region25: #{rotary_embedding_qkv.1} parent=5 // pred_check
        _
      $region26: #{rotary_embedding_qkv.1} parent=5 // pred_check_branch
        %176 = sbr.rel (%p173) target = $region28
      $region27: #{rotary_embedding_qkv.1} parent=5 // pred_region
        %s177 = ssub.s32 %s14, 1
        %s178 = sand.u32 %s76, 1
        %s179 = scalar_lea.sflag [#allocation3], %s178
        %s180 = sand.u32 %s76, 1
        %s181 = smul.addr %s180, 32
        %s182 = scalar_lea.vmem [#allocation2], %s181
        // Predicated region
        $region29: #{rotary_embedding_qkv.1} parent=27 // pred_check
          %p183 = pneg %p89
        $region30: #{rotary_embedding_qkv.1} parent=27 // pred_check_branch
          %185 = sbr.rel (%p183) target = $region32
        $region31: #{rotary_embedding_qkv.1} parent=27 // pred_region
          %187 = dma.done %s179, 512
        $region32: #{rotary_embedding_qkv.1} parent=27 // pred_fallthru
          _
        %p188 = scmp.lt.s32.totalorder %s24, 0
        %s189 = scalar_select %p188, %s24, 0
        %s190 = smul.addr %s189, 8
        %s191 = scalar_lea.vmem %s0, %s190
        %p192 = pneg %p59
        %p193 = pneg %p56
        %s194 = sand.u32 %s76, 1
        %s195 = scalar_lea.sflag [#allocation3], %s194
        %s196 = sand.u32 %s76, 1
        %s197 = smul.addr %s196, 32
        %s198 = scalar_lea.vmem [#allocation2], %s197
        %p199 = pneg %p89
        %p200 = pneg %p86
        %p201 = pneg %p119
        %p202 = pneg %p116
        %s203 = sand.u32 %s106, 1
        %s204 = scalar_lea.sflag [#allocation4], %s203
        %s205 = sand.u32 %s106, 1
        %s206 = smul.addr %s205, 32
        %s207 = scalar_lea.vmem [#allocation5], %s206
        %p208 = scmp.lt.s32.totalorder %s24, 0
        %s209 = scalar_select %p208, %s24, 0
        %s210 = smul.addr %s209, 8
        %s211 = scalar_lea.vmem %s0, %s210
        %s212 = smul.u32 8, %s24
        %s213 = smul.u32 8, %s24
        %v214 = vld [vmem:[%s211] sm:$0xff]
        %v216 = vrot.slane %v214, 1
        %v217 = vrot.slane %v214, 2
        %v218 = vrot.slane %v214, 3
        %v219 = vrot.slane %v214, 4
        %v220 = vrot.slane %v214, 5
        %v221 = vrot.slane %v214, 6
        %v222 = vrot.slane %v214, 7
        %s223 = scalar_lea.vmem %s211, 8
        %v224 = vld [vmem:[%s223] sm:$0xff]
        %v226 = vrot.slane %v224, 1
        %v227 = vrot.slane %v224, 2
        %v228 = vrot.slane %v224, 3
        %v229 = vrot.slane %v224, 4
        %v230 = vrot.slane %v224, 5
        %v231 = vrot.slane %v224, 6
        %v232 = vrot.slane %v224, 7
        %v233 = vld [vmem:[%s182] sm:$0xf]
        %v234 = vld [vmem:[%s182 + $0x4] sm:$0xf]
        %v235 = vld [vmem:[%s182 + $0x8] sm:$0xf]
        %v236 = vld [vmem:[%s182 + $0xc] sm:$0xf]
        %v237 = vld [vmem:[%s182 + $0x10] sm:$0xf]
        %v238 = vld [vmem:[%s182 + $0x14] sm:$0xf]
        %v239 = vld [vmem:[%s182 + $0x18] sm:$0xf]
        %v240 = vld [vmem:[%s182 + $0x1c] sm:$0xf]
        %v241 = vperm.slane %v214, 0
        %v242 = vperm.slane %v216, 0
        %v243 = vperm.slane %v217, 0
        %v244 = vperm.slane %v218, 0
        %v245 = vperm.slane %v219, 0
        %v246 = vperm.slane %v220, 0
        %v247 = vperm.slane %v221, 0
        %v248 = vperm.slane %v222, 0
        %v257 = vmul.f32 %v233, %v241
        %v258 = vmul.f32 %v234, %v242
        %v259 = vmul.f32 %v235, %v243
        %v260 = vmul.f32 %v236, %v244
        %v261 = vmul.f32 %v237, %v245
        %v262 = vmul.f32 %v238, %v246
        %v263 = vmul.f32 %v239, %v247
        %v264 = vmul.f32 %v240, %v248
        %v265 = vperm.slane %v224, 0
        %v266 = vperm.slane %v226, 0
        %v267 = vperm.slane %v227, 0
        %v268 = vperm.slane %v228, 0
        %v269 = vperm.slane %v229, 0
        %v270 = vperm.slane %v230, 0
        %v271 = vperm.slane %v231, 0
        %v272 = vperm.slane %v232, 0
        %281 = vrot.lane.b32.xlu0 %v265, 8
        %v282 = vpop.permute.xlu0 %281
        %283 = vrot.lane.b32.xlu0 %v266, 8
        %v284 = vpop.permute.xlu0 %283
        %285 = vrot.lane.b32.xlu0 %v267, 8
        %v286 = vpop.permute.xlu0 %285
        %287 = vrot.lane.b32.xlu0 %v268, 8
        %v288 = vpop.permute.xlu0 %287
        %289 = vrot.lane.b32.xlu0 %v269, 8
        %v290 = vpop.permute.xlu0 %289
        %291 = vrot.lane.b32.xlu0 %v270, 8
        %v292 = vpop.permute.xlu0 %291
        %293 = vrot.lane.b32.xlu0 %v271, 8
        %v294 = vpop.permute.xlu0 %293
        %295 = vrot.lane.b32.xlu0 %v272, 8
        %v296 = vpop.permute.xlu0 %295
        %v305 = vmul.f32 %v233, %v282
        %v306 = vmul.f32 %v234, %v284
        %v307 = vmul.f32 %v235, %v286
        %v308 = vmul.f32 %v236, %v288
        %v309 = vmul.f32 %v237, %v290
        %v310 = vmul.f32 %v238, %v292
        %v311 = vmul.f32 %v239, %v294
        %v312 = vmul.f32 %v240, %v296
        %321 = vrot.lane.b32.xlu0 %v305, 120
        %v322 = vpop.permute.xlu0 %321
        %323 = vrot.lane.b32.xlu0 %v306, 120
        %v324 = vpop.permute.xlu0 %323
        %325 = vrot.lane.b32.xlu0 %v307, 120
        %v326 = vpop.permute.xlu0 %325
        %327 = vrot.lane.b32.xlu0 %v308, 120
        %v328 = vpop.permute.xlu0 %327
        %329 = vrot.lane.b32.xlu0 %v309, 120
        %v330 = vpop.permute.xlu0 %329
        %331 = vrot.lane.b32.xlu0 %v310, 120
        %v332 = vpop.permute.xlu0 %331
        %333 = vrot.lane.b32.xlu0 %v311, 120
        %v334 = vpop.permute.xlu0 %333
        %335 = vrot.lane.b32.xlu0 %v312, 120
        %v336 = vpop.permute.xlu0 %335
        %v345 = vsub.f32 %v257, %v322
        %v346 = vsub.f32 %v258, %v324
        %v347 = vsub.f32 %v259, %v326
        %v348 = vsub.f32 %v260, %v328
        %v349 = vsub.f32 %v261, %v330
        %v350 = vsub.f32 %v262, %v332
        %v351 = vsub.f32 %v263, %v334
        %v352 = vsub.f32 %v264, %v336
        %vm353 = vcmask 60416
        %354 = vst.msk [vmem:[%s207] sm:$0xf] %vm353, %v345
        %355 = vst.msk [vmem:[%s207 + $0x4] sm:$0xf] %vm353, %v346
        %356 = vst.msk [vmem:[%s207 + $0x8] sm:$0xf] %vm353, %v347
        %357 = vst.msk [vmem:[%s207 + $0xc] sm:$0xf] %vm353, %v348
        %358 = vst.msk [vmem:[%s207 + $0x10] sm:$0xf] %vm353, %v349
        %359 = vst.msk [vmem:[%s207 + $0x14] sm:$0xf] %vm353, %v350
        %360 = vst.msk [vmem:[%s207 + $0x18] sm:$0xf] %vm353, %v351
        %361 = vst.msk [vmem:[%s207 + $0x1c] sm:$0xf] %vm353, %v352
        %v362 = vmul.f32 %v233, %v265
        %v363 = vmul.f32 %v234, %v266
        %v364 = vmul.f32 %v235, %v267
        %v365 = vmul.f32 %v236, %v268
        %v366 = vmul.f32 %v237, %v269
        %v367 = vmul.f32 %v238, %v270
        %v368 = vmul.f32 %v239, %v271
        %v369 = vmul.f32 %v240, %v272
        %370 = vrot.lane.b32.xlu0 %v241, 8
        %v371 = vpop.permute.xlu0 %370
        %372 = vrot.lane.b32.xlu0 %v242, 8
        %v373 = vpop.permute.xlu0 %372
        %374 = vrot.lane.b32.xlu0 %v243, 8
        %v375 = vpop.permute.xlu0 %374
        %376 = vrot.lane.b32.xlu0 %v244, 8
        %v377 = vpop.permute.xlu0 %376
        %378 = vrot.lane.b32.xlu0 %v245, 8
        %v379 = vpop.permute.xlu0 %378
        %380 = vrot.lane.b32.xlu0 %v246, 8
        %v381 = vpop.permute.xlu0 %380
        %382 = vrot.lane.b32.xlu0 %v247, 8
        %v383 = vpop.permute.xlu0 %382
        %384 = vrot.lane.b32.xlu0 %v248, 8
        %v385 = vpop.permute.xlu0 %384
        %v394 = vmul.f32 %v233, %v371
        %v395 = vmul.f32 %v234, %v373
        %v396 = vmul.f32 %v235, %v375
        %v397 = vmul.f32 %v236, %v377
        %v398 = vmul.f32 %v237, %v379
        %v399 = vmul.f32 %v238, %v381
        %v400 = vmul.f32 %v239, %v383
        %v401 = vmul.f32 %v240, %v385
        %410 = vrot.lane.b32.xlu0 %v394, 120
        %v411 = vpop.permute.xlu0 %410
        %412 = vrot.lane.b32.xlu0 %v395, 120
        %v413 = vpop.permute.xlu0 %412
        %414 = vrot.lane.b32.xlu0 %v396, 120
        %v415 = vpop.permute.xlu0 %414
        %416 = vrot.lane.b32.xlu0 %v397, 120
        %v417 = vpop.permute.xlu0 %416
        %418 = vrot.lane.b32.xlu0 %v398, 120
        %v419 = vpop.permute.xlu0 %418
        %420 = vrot.lane.b32.xlu0 %v399, 120
        %v421 = vpop.permute.xlu0 %420
        %422 = vrot.lane.b32.xlu0 %v400, 120
        %v423 = vpop.permute.xlu0 %422
        %424 = vrot.lane.b32.xlu0 %v401, 120
        %v425 = vpop.permute.xlu0 %424
        %v434 = vadd.f32 %v362, %v411
        %v435 = vadd.f32 %v363, %v413
        %v436 = vadd.f32 %v364, %v415
        %v437 = vadd.f32 %v365, %v417
        %v438 = vadd.f32 %v366, %v419
        %v439 = vadd.f32 %v367, %v421
        %v440 = vadd.f32 %v368, %v423
        %v441 = vadd.f32 %v369, %v425
        %450 = vrot.lane.b32.xlu0 %v434, 8
        %v451 = vpop.permute.xlu0 %450
        %452 = vrot.lane.b32.xlu0 %v435, 8
        %v453 = vpop.permute.xlu0 %452
        %454 = vrot.lane.b32.xlu0 %v436, 8
        %v455 = vpop.permute.xlu0 %454
        %456 = vrot.lane.b32.xlu0 %v437, 8
        %v457 = vpop.permute.xlu0 %456
        %458 = vrot.lane.b32.xlu0 %v438, 8
        %v459 = vpop.permute.xlu0 %458
        %460 = vrot.lane.b32.xlu0 %v439, 8
        %v461 = vpop.permute.xlu0 %460
        %462 = vrot.lane.b32.xlu0 %v440, 8
        %v463 = vpop.permute.xlu0 %462
        %464 = vrot.lane.b32.xlu0 %v441, 8
        %v465 = vpop.permute.xlu0 %464
        %vm474 = vcmask 126016
        %475 = vst.msk [vmem:[%s207] sm:$0xf] %vm474, %v451
        %476 = vst.msk [vmem:[%s207 + $0x4] sm:$0xf] %vm474, %v453
        %477 = vst.msk [vmem:[%s207 + $0x8] sm:$0xf] %vm474, %v455
        %478 = vst.msk [vmem:[%s207 + $0xc] sm:$0xf] %vm474, %v457
        %479 = vst.msk [vmem:[%s207 + $0x10] sm:$0xf] %vm474, %v459
        %480 = vst.msk [vmem:[%s207 + $0x14] sm:$0xf] %vm474, %v461
        %481 = vst.msk [vmem:[%s207 + $0x18] sm:$0xf] %vm474, %v463
        %482 = vst.msk [vmem:[%s207 + $0x1c] sm:$0xf] %vm474, %v465
        %vm483 = vcmask 257152
        %484 = vst.msk [vmem:[%s207] sm:$0xf] %vm483, %v233
        %485 = vst.msk [vmem:[%s207 + $0x4] sm:$0xf] %vm483, %v234
        %486 = vst.msk [vmem:[%s207 + $0x8] sm:$0xf] %vm483, %v235
        %487 = vst.msk [vmem:[%s207 + $0xc] sm:$0xf] %vm483, %v236
        %488 = vst.msk [vmem:[%s207 + $0x10] sm:$0xf] %vm483, %v237
        %489 = vst.msk [vmem:[%s207 + $0x14] sm:$0xf] %vm483, %v238
        %490 = vst.msk [vmem:[%s207 + $0x18] sm:$0xf] %vm483, %v239
        %491 = vst.msk [vmem:[%s207 + $0x1c] sm:$0xf] %vm483, %v240
        %s492 = sand.u32 %s106, 1
        %s493 = scalar_lea.sflag [#allocation4], %s492
        %s494 = sand.u32 %s106, 1
        %s495 = smul.addr %s494, 32
        %s496 = scalar_lea.vmem [#allocation5], %s495
        // Predicated region
        $region33: #{rotary_embedding_qkv.1} parent=27 // pred_check
          %p497 = pneg %p116
        $region34: #{rotary_embedding_qkv.1} parent=27 // pred_check_branch
          %499 = sbr.rel (%p497) target = $region36
        $region35: #{rotary_embedding_qkv.1} parent=27 // pred_region
          %s500 = smul.u32 8, %s24
          %502 = vsyncadd %s493, 0
          %s503 = smul.addr %s500, 3
          %s504 = sadd.s32 %s26, %s503
          %s505 = smul.addr %s25, 24
          %s506 = sadd.s32 %s504, %s505
          %s507 = smul.addr %s506, 4
          %s508 = scalar_lea.hbm %s2, %s507
          %s509 = sshll.u32 %s496, 4
          %s510 = int_to_ptr.vmem [resolvable:$true] %s509
          %s511 = sshll.u32 %s508, 4
          %s512 = int_to_ptr.hbm [resolvable:$true] %s511
          %517 = dma.vmem_to_hbm [thread:$0]  %s510, 512, %s512, %s493, 64, 192, 4
        $region36: #{rotary_embedding_qkv.1} parent=27 // pred_fallthru
          _
      $region28: #{rotary_embedding_qkv.1} parent=5 // pred_fallthru
        _
      %p518 = scmp.le.s32.totalorder 2, %s14
      // Predicated region
      $region37: #{rotary_embedding_qkv.1} parent=5 // pred_check
        %p519 = pneg %p518
      $region38: #{rotary_embedding_qkv.1} parent=5 // pred_check_branch
        %521 = sbr.rel (%p519) target = $region40
      $region39: #{rotary_embedding_qkv.1} parent=5 // pred_region
        %s522 = ssub.s32 %s14, 2
        // Predicated region
        $region41: #{rotary_embedding_qkv.1} parent=39 // pred_check
          %p523 = pneg %p122
        $region42: #{rotary_embedding_qkv.1} parent=39 // pred_check_branch
          %525 = sbr.rel (%p523) target = $region44
        $region43: #{rotary_embedding_qkv.1} parent=39 // pred_region
          %s526 = sand.u32 %s107, 1
          %s527 = scalar_lea.sflag [#allocation4], %s526
          %s528 = sand.u32 %s107, 1
          %s529 = smul.addr %s528, 32
          %s530 = scalar_lea.vmem [#allocation5], %s529
          %532 = dma.done %s527, 512
        $region44: #{rotary_embedding_qkv.1} parent=39 // pred_fallthru
          _
      $region40: #{rotary_embedding_qkv.1} parent=5 // pred_fallthru
        _
    $region6: #{rotary_embedding_qkv.1} parent=1 // loop_footer
      %s18 = sadd.s32 1, %s14
    $region7: #{rotary_embedding_qkv.1} parent=1 // loop_footer_branch
      %13 = sbr.rel target = $region3
    $region8: #{rotary_embedding_qkv.1} parent=1 // loop_exit
      _
    %533 = vsyncpa [#allocation3], 1
    %s534 = scalar_lea.sflag [#allocation3], 1
    %535 = vsyncpa %s534, 1
    %536 = vsyncpa [#allocation4], 1
    %s537 = scalar_lea.sflag [#allocation4], 1
    %538 = vsyncpa %s537, 1

</llo_original>
